<compile_context>
chip_gen: v7x
topology: tpu7x:2x2x1
jax: 0.10.0
libtpu: 0.0.40
codegen_flags: <defaults>
</compile_context>

<pallas_src>
import jax
import jax.numpy as jnp
from jax.experimental import pallas as pl
from jax.experimental.pallas import tpu as pltpu

_LANE = 128
_SUBLANE = 8
_MIN_STEPS = 8                 # >= 2 TCs (v7x) * >= 4 pipeline stages in flight
_MIN_PIPELINE_BYTES = 2 << 20  # only enforce grid depth once slab is non-trivial
_MAX_F_TILE = 2048             # when F must be tiled, keep blocks modest; grow T


def _cdiv(a, b):
    return -(-a // b)


def _round_down(v, m):
    return (v // m) * m


def _tcoder_kernel(x_ref, times_ref, o_ref):
    # x_ref:     (block_b, f_tile, t_tile) VMEM tile
    # times_ref: (block_b, 1,      t_tile) VMEM tile
    # Compute tcodes in f32 regardless of input dtype (v5e EUP/VPU have no
    # bf16 path anyway, and this matches the f32 PyTorch reference); the
    # broadcast over the F (sublane) axis is free VPU work for a mem-bound op.
    t = times_ref[...].astype(jnp.float32)
    tcodes = jnp.cos(3.14159 * t) + 1.0                       # (block_b, 1, t_tile)
    x = x_ref[...].astype(jnp.float32)
    o_ref[...] = (x * tcodes).astype(o_ref.dtype)


def _vmem_budgets(tile_budget_bytes, vmem_limit_bytes):
    """Generation-aware defaults: conservative on 64 MiB-VMEM parts (v7x)."""
    if tile_budget_bytes is not None and vmem_limit_bytes is not None:
        return tile_budget_bytes, vmem_limit_bytes
    try:
        info = pltpu.get_tpu_info()
        vmem_cap = getattr(info, "vmem_capacity_bytes", 64 << 20)
    except Exception:  # pragma: no cover - query unavailable; assume smallest VMEM
        vmem_cap = 64 << 20
    if vmem_cap >= (128 << 20):          # v5e / v6e: plenty of headroom
        budget, limit = 48 << 20, 64 << 20
    else:                                # v7x: 64 MiB physical per TensorCore
        budget, limit = 24 << 20, 32 << 20
    return (tile_budget_bytes or budget), (vmem_limit_bytes or limit)


def _choose_tiles(B, F, T, itemsize, budget_bytes):
    """Pick (block_b, f_tile, t_tile).

    `budget_bytes` bounds the double-buffered in + out footprint of one block,
    i.e. 4 * block_b * f_tile * t_tile * itemsize.
    """
    per_elem = 4 * itemsize  # 2x (pipelined) input tile + 2x output tile

    # ---- F tile: keep full F unless even a 128-wide full-F column blows VMEM.
    t_min = T if T <= _LANE else _LANE
    if per_elem * F * t_min <= budget_bytes:
        f_tile = F
    else:
        rows = _round_down(budget_bytes // (per_elem * _LANE), _SUBLANE)
        f_tile = max(_SUBLANE, min(rows, _MAX_F_TILE))

    # ---- T tile: largest lane-dense width under budget (full T when T <= 128).
    if T <= _LANE:
        t_tile = T
    else:
        cols = budget_bytes // (per_elem * f_tile)
        t_tile = max(_LANE, _round_down(cols, _LANE))
        t_tile = min(t_tile, _cdiv(T, _LANE) * _LANE)

    # ---- Batch blocking: when one batch fits wholly in a block and is small,
    # pack several batches per step to amortize per-step overhead.
    block_b = 1
    if f_tile >= F and t_tile >= T and B > 1:
        block_b = max(1, min(B, budget_bytes // (per_elem * F * t_tile)))

    # ---- Enforce a minimum grid depth (pipelining + v7x megacore) once the
    # total HBM traffic is non-trivial.
    hbm_bytes = 2 * B * F * T * itemsize

    def n_steps():
        return _cdiv(B, block_b) * _cdiv(F, f_tile) * _cdiv(T, t_tile)

    if hbm_bytes > _MIN_PIPELINE_BYTES:
        while n_steps() < _MIN_STEPS and block_b > 1:
            block_b = max(1, block_b // 2)
        while n_steps() < _MIN_STEPS and t_tile > _LANE:
            t_tile = max(_LANE, _round_down(t_tile // 2, _LANE))
        while n_steps() < _MIN_STEPS and f_tile > _SUBLANE:
            new_f = max(_SUBLANE, _round_down(f_tile // 2, _SUBLANE))
            if new_f == f_tile:
                break
            f_tile = new_f

    return block_b, f_tile, t_tile


def temporal_coder_nonlinear(x, times, *,
                             tile_budget_bytes=None,
                             vmem_limit_bytes=None):
    """x: [B, F, T], times: [B, 1, T] -> [B, F, T] (same dtype as x)."""
    B, F, T = x.shape
    assert times.shape == (B, 1, T)
    dtype = x.dtype
    itemsize = jnp.dtype(dtype).itemsize

    budget, vmem_limit = _vmem_budgets(tile_budget_bytes, vmem_limit_bytes)
    block_b, f_tile, t_tile = _choose_tiles(B, F, T, itemsize, budget)

    # Grid order (B, T, F): F innermost so the (b, 0, t) times block index is
    # unchanged across F steps and its tiny DMA is not re-issued.
    grid = (pl.cdiv(B, block_b), pl.cdiv(T, t_tile), pl.cdiv(F, f_tile))

    # Advisory hint for XLA's scheduler around the custom call.
    cost = pl.CostEstimate(
        flops=B * F * T + 2 * B * T,
        transcendentals=B * T,
        bytes_accessed=(2 * B * F * T + B * T) * itemsize,
    )

    return pl.pallas_call(
        _tcoder_kernel,
        out_shape=jax.ShapeDtypeStruct((B, F, T), dtype),
        grid_spec=pltpu.PrefetchScalarGridSpec(
            num_scalar_prefetch=0,
            grid=grid,
            in_specs=[
                pl.BlockSpec((block_b, f_tile, t_tile), lambda b, t, f: (b, f, t)),
                pl.BlockSpec((block_b, 1, t_tile), lambda b, t, f: (b, 0, t)),
            ],
            out_specs=pl.BlockSpec((block_b, f_tile, t_tile),
                                   lambda b, t, f: (b, f, t)),
        ),
        compiler_params=pltpu.CompilerParams(
            # Every output block is distinct -> all axes independent; lets the
            # runtime shard steps across both v7x TensorCores.
            dimension_semantics=("parallel", "parallel", "parallel"),
            vmem_limit_bytes=vmem_limit,
        ),
        cost_estimate=cost,
    )(x, times)


def temporal_coder_nonlinear_ref(x, times):
    """Pure-JAX reference mirroring the PyTorch forward."""
    tcodes = jnp.cos(3.14159 * times.astype(jnp.float32)) + 1.0
    return (x.astype(jnp.float32) * jnp.tile(tcodes, (1, x.shape[1], 1))).astype(x.dtype)


if __name__ == "__main__":
    # Small shapes consistent with the module: batch=2, feat_size=32, seq(T)=128.
    B, FEAT, T = 2, 32, 128
    key = jax.random.PRNGKey(0)
    kx, kt = jax.random.split(key)
    x = jax.random.normal(kx, (B, FEAT, T), dtype=jnp.float32)
    times = jax.random.uniform(kt, (B, 1, T), dtype=jnp.float32)

    out = jax.block_until_ready(temporal_coder_nonlinear(x, times))
    ref = temporal_coder_nonlinear_ref(x, times)
    assert out.shape == (B, FEAT, T)
    assert jnp.allclose(out, ref, atol=1e-5, rtol=1e-5)

    # Exercise the tiled path with ragged (masked) boundary blocks on both the
    # F and T axes by forcing a small per-block VMEM budget. No pad / slice.
    B2, F2, T2 = 2, 60, 300
    x2 = jax.random.normal(kx, (B2, F2, T2), dtype=jnp.float32)
    t2 = jax.random.uniform(kt, (B2, 1, T2), dtype=jnp.float32)
    out2 = jax.block_until_ready(
        temporal_coder_nonlinear(x2, t2, tile_budget_bytes=64 * 1024))
    assert jnp.allclose(out2, temporal_coder_nonlinear_ref(x2, t2),
                        atol=1e-5, rtol=1e-5)

    print("KERNEL_OK")
</pallas_src>

<mosaic_0001>
module attributes {stable_mosaic.version = 11 : i64} {
  func.func @_tcoder_kernel(%arg0: i32, %arg1: i32, %arg2: i32, %arg3: memref<2x32x128xf32, #tpu.memory_space<vmem>>, %arg4: memref<2x1x128xf32, #tpu.memory_space<vmem>>, %arg5: memref<2x32x128xf32, #tpu.memory_space<vmem>>) attributes {dimension_semantics = [#tpu.dimension_semantics<parallel>, #tpu.dimension_semantics<parallel>, #tpu.dimension_semantics<parallel>], iteration_bounds = array<i64: 1, 1, 1>, scalar_prefetch = 0 : i64, scratch_operands = 0 : i64, tpu.core_type = #tpu.core_type<tc>, window_params = [{transform_indices = @transform_0, window_bounds = array<i64: 2, 32, 128>}, {transform_indices = @transform_1, window_bounds = array<i64: 2, 1, 128>}, {transform_indices = @transform_2, window_bounds = array<i64: 2, 32, 128>}]} {
    %c0 = arith.constant 0 : index
    %c0_0 = arith.constant 0 : index
    %c0_1 = arith.constant 0 : index
    %0 = vector.load %arg4[%c0, %c0_0, %c0_1] : memref<2x1x128xf32, #tpu.memory_space<vmem>>, vector<2x1x128xf32>
    %cst = arith.constant 3.141590e+00 : f32
    %1 = vector.broadcast %cst : f32 to vector<2x1x128xf32>
    %2 = arith.mulf %1, %0 : vector<2x1x128xf32>
    %3 = math.cos %2 : vector<2x1x128xf32>
    %cst_2 = arith.constant 1.000000e+00 : f32
    %4 = vector.broadcast %cst_2 : f32 to vector<2x1x128xf32>
    %5 = arith.addf %3, %4 : vector<2x1x128xf32>
    %c0_3 = arith.constant 0 : index
    %c0_4 = arith.constant 0 : index
    %c0_5 = arith.constant 0 : index
    %6 = vector.load %arg3[%c0_3, %c0_4, %c0_5] : memref<2x32x128xf32, #tpu.memory_space<vmem>>, vector<2x32x128xf32>
    %7 = vector.broadcast %5 : vector<2x1x128xf32> to vector<2x32x128xf32>
    %8 = arith.mulf %6, %7 : vector<2x32x128xf32>
    %c0_6 = arith.constant 0 : index
    %c0_7 = arith.constant 0 : index
    %c0_8 = arith.constant 0 : index
    %9 = vector.load %arg5[%c0_6, %c0_7, %c0_8] : memref<2x32x128xf32, #tpu.memory_space<vmem>>, vector<2x32x128xf32>
    tpu.vector_store %arg5[%c0_6, %c0_7, %c0_8], %8 {strides = array<i32>} : memref<2x32x128xf32, #tpu.memory_space<vmem>>, vector<2x32x128xf32>,
    return
  }
  func.func @transform_0(%arg0: i32, %arg1: i32, %arg2: i32) -> (i32, i32, i32) {
    %c0_i32 = arith.constant 0 : i32
    return %arg0, %arg2, %arg1 : i32, i32, i32
  }
  func.func @transform_1(%arg0: i32, %arg1: i32, %arg2: i32) -> (i32, i32, i32) {
    %c0_i32 = arith.constant 0 : i32
    %c0_i32_0 = arith.constant 0 : i32
    return %arg0, %c0_i32, %arg1 : i32, i32, i32
  }
  func.func @transform_2(%arg0: i32, %arg1: i32, %arg2: i32) -> (i32, i32, i32) {
    %c0_i32 = arith.constant 0 : i32
    return %arg0, %arg2, %arg1 : i32, i32, i32
  }
}

</mosaic_0001>

<llo_original>
// kernel: tpu_custom_call.1
$region0: #{tpu_custom_call.1}
  #allocation0 [shape = 'u32[]', space=smem, size = 0x4, offset = 0x4, fixed_abs, tag = 'smem constant byte address 0x4 - core index']
  #allocation1 [shape = 'u32[144,128]{1,0:T(1,128)}', space=vmem, size = 0x12000, scoped, tag = 'internal scratch']
  %s0 = inlined_call_operand.hbm [shape: f32[2,32,128], index: 0, kind: input, shape index: {}]
  %s1 = inlined_call_operand.vmem [shape: f32[2,1,128], index: 1, kind: input, shape index: {}]
  %s2 = inlined_call_operand.hbm [shape: f32[2,32,128], index: 2, kind: output, shape index: {}]
  %s3 = sld [smem:[#allocation0]]
  $region22: #{tpu_custom_call.1} parent=0
    _
  %s5 = ssub.s32 1, %s3
  %s6 = scalar_select 0, %s5, %s3
  $region1: #{tpu_custom_call.1} parent=0
    #allocation2 [shape = 'u8[32768]{0}', space=vmem, size = 0x8000, scoped, tag = 'input window, operand 0, single buffered']
    #allocation3 [shape = 's32[1]{0}', space=sflag, size = 0x4, scoped, tag = 'scoped memory for tpu_custom_call.1']
    #allocation4 [shape = 's32[1]{0}', space=sflag, size = 0x4, scoped, tag = 'scoped memory for tpu_custom_call.1']
    #allocation5 [shape = 'u8[32768]{0}', space=vmem, size = 0x8000, scoped, tag = 'output window, operand 0, single buffered']
    %7 = vsyncpa [#allocation3], 0
    %8 = vsyncpa [#allocation4], 0
    // Predicated region
    $region2: #{tpu_custom_call.1} parent=1 // pred_check
      _
    $region3: #{tpu_custom_call.1} parent=1 // pred_check_branch
      %10 = sbr.rel (0) target = $region5
    $region4: #{tpu_custom_call.1} parent=1 // pred_region
      %s12 = ssub.s32 1024, 1024
      %13 = vsyncadd [#allocation3], %s12
      %s14 = sshll.u32 [#allocation2], 4
      %s15 = int_to_ptr.vmem [resolvable:$true] %s14
      %20 = dma.hbm_to_vmem [thread:$0]  %s0, 1024, %s15, [#allocation3], 128, 128, 8
    $region5: #{tpu_custom_call.1} parent=1 // pred_fallthru
      _
    // Predicated region
    $region6: #{tpu_custom_call.1} parent=1 // pred_check
      _
    $region7: #{tpu_custom_call.1} parent=1 // pred_check_branch
      %22 = sbr.rel (0) target = $region9
    $region8: #{tpu_custom_call.1} parent=1 // pred_region
      _
    $region9: #{tpu_custom_call.1} parent=1 // pred_fallthru
      _
    // Predicated region
    $region10: #{tpu_custom_call.1} parent=1 // pred_check
      _
    $region11: #{tpu_custom_call.1} parent=1 // pred_check_branch
      %24 = sbr.rel (0) target = $region13
    $region12: #{tpu_custom_call.1} parent=1 // pred_region
      %25 = dma.done [#allocation3], 1024
    $region13: #{tpu_custom_call.1} parent=1 // pred_fallthru
      _
    %v26 = vld [vmem:[%s1] sm:$0x1]
    %v27 = vld [vmem:[%s1 + $0x1] sm:$0x1]
    %v28 = vmul.f32 %v26, 3.14159
    %v29 = vmul.f32 %v27, 3.14159
    %v30 = vand.u32 2147483647, %v28
    %vm31 = vcmp.le.f32.partialorder %v30, 0.7853982
    %vm32 = vcmp.lt.s32.totalorder %v28, 0
    %v33 = vand.u32 %v28, 2139095040
    %v34 = vshrl.u32 %v33, 23
    %v35 = vsub.s32 %v34, 127
    %v36 = vand.u32 2147483647, %v28
    %v37 = vand.u32 %v36, 8388607
    %v38 = vor.u32 %v37, 8388608
    %v39 = vsub.s32 0, %v38
    %v40 = vadd.s32 %v35, 1
    %vm41 = vcmp.gt.s32.totalorder %v40, 0
    %v42 = vsel %vm41, %v40, 0
    %v43 = vshrl.u32 %v42, 5
    %v44 = vand.u32 %v42, 31
    %v45 = vsub.s32 32, %v44
    %v46 = vshrl.u32 683565275, %v45
    %v47 = vshll.u32 683565275, %v44
    %v48 = vshrl.u32 2475754826, %v45
    %v49 = vor.u32 %v47, %v48
    %v50 = vshll.u32 2475754826, %v44
    %v51 = vshrl.u32 2131351028, %v45
    %v52 = vor.u32 %v50, %v51
    %v53 = vshll.u32 2131351028, %v44
    %v54 = vshrl.u32 2102212464, %v45
    %v55 = vor.u32 %v53, %v54
    %v56 = vshll.u32 2102212464, %v44
    %v57 = vshrl.u32 920167782, %v45
    %v58 = vor.u32 %v56, %v57
    %v59 = vshll.u32 920167782, %v44
    %v60 = vshrl.u32 1326507024, %v45
    %v61 = vor.u32 %v59, %v60
    %vm62 = vcmp.lt.s32.totalorder %v43, 1
    %vm63 = vcmp.lt.s32.totalorder %v43, 2
    %vm64 = vcmp.lt.s32.totalorder %v43, 3
    %vm65 = vcmp.lt.s32.totalorder %v43, 4
    %v66 = vsel %vm62, %v46, %v49
    %v67 = vsel %vm65, %v55, 2102212464
    %v68 = vsel %vm64, %v52, %v67
    %v69 = vsel %vm63, %v66, %v68
    %v70 = vsel %vm62, %v49, %v52
    %v71 = vsel %vm65, %v58, 920167782
    %v72 = vsel %vm64, %v55, %v71
    %v73 = vsel %vm63, %v70, %v72
    %v74 = vsel %vm62, %v52, %v55
    %v75 = vsel %vm65, %v61, 1326507024
    %v76 = vsel %vm64, %v58, %v75
    %v77 = vsel %vm63, %v74, %v76
    %v78 = vshll.u32 %v38, 8
    %v79 = vmul.u32.u64.compose %v78, %v77
    %v80 = vextract.low.u32 %v79
    %v81 = vextract.high.u32 %v79
    %v82 = vmul.u32.u64.compose %v78, %v73
    %v83 = vextract.low.u32 %v82
    %v84 = vextract.high.u32 %v82
    %v85 = vmul.u32 %v78, %v69
    %v86 = vadd.s32 %v81, %v83
    %vm87 = vc.u32 %v81, %v83
    %v88 = vadd.s32 %v84, 1
    %v89 = vsel %vm87, %v88, %v84
    %v90 = vadd.s32 %v85, %v89
    %v91 = vadd.s32 %v90, 536870912
    %v92 = vshrl.u32 %v91, 30
    %v93 = vshll.u32 %v92, 30
    %v94 = vsub.s32 %v90, %v93
    %vm95 = vcmp.lt.s32.totalorder %v94, 0
    %v96 = vsub.s32 0, %v94
    %v97 = vsel %vm95, %v96, %v94
    %v98 = vclz %v97
    %v99 = vsub.s32 %v98, 2
    %vm100 = vcmp.gt.s32.totalorder 0, %v99
    %v101 = vsel %vm100, 0, %v99
    %v102 = vsub.s32 32, %v101
    %v103 = vshll.u32 %v94, %v101
    %v104 = vshrl.u32 %v86, %v102
    %v105 = vor.u32 %v103, %v104
    %v106 = vsub.s32 4294967266, %v101
    %v107 = vadd.s32 %v106, 127
    %v108 = vshll.u32 %v107, 23
    %v109 = vor.u32 4788187, %v108
    %v110 = vand.u32 2147483647, %v109
    %v112 = vcvt.s32.f32 %v105
    %v113 = vmul.f32 %v112, %v110
    %v114 = vxor.u32 %v113, 2147483648
    %v115 = vsel %vm32, %v114, %v113
    %v116 = vsub.s32 4, %v92
    %v117 = vsel %vm32, %v116, %v92
    %v118 = vsel %vm31, %v28, %v115
    %v119 = vsel %vm31, 0, %v117
    %v120 = vcosq.f32.pop %v118
    %v121 = vsinq.f32.pop %v118
    %vm122 = vweird.f32 %v28
    %v123 = vand.u32 %v119, 3
    %vm124 = vcmp.lt.s32.totalorder %v123, 2
    %vm125 = vcmp.eq.s32.totalorder %v123, 0
    %v126 = vxor.u32 %v121, 2147483648
    %v127 = vsel %vm125, %v120, %v126
    %vm128 = vcmp.eq.s32.totalorder %v123, 2
    %v129 = vxor.u32 %v120, 2147483648
    %v130 = vsel %vm128, %v129, %v121
    %v131 = vsel %vm124, %v127, %v130
    %v132 = vsel %vm122, nan, %v131
    %v133 = vand.u32 2147483647, %v29
    %vm134 = vcmp.le.f32.partialorder %v133, 0.7853982
    %vm135 = vcmp.lt.s32.totalorder %v29, 0
    %v136 = vand.u32 %v29, 2139095040
    %v137 = vshrl.u32 %v136, 23
    %v138 = vsub.s32 %v137, 127
    %v139 = vand.u32 2147483647, %v29
    %v140 = vand.u32 %v139, 8388607
    %v141 = vor.u32 %v140, 8388608
    %v142 = vsub.s32 0, %v141
    %v143 = vadd.s32 %v138, 1
    %vm144 = vcmp.gt.s32.totalorder %v143, 0
    %v145 = vsel %vm144, %v143, 0
    %v146 = vshrl.u32 %v145, 5
    %v147 = vand.u32 %v145, 31
    %v148 = vsub.s32 32, %v147
    %v149 = vshrl.u32 683565275, %v148
    %v150 = vshll.u32 683565275, %v147
    %v151 = vshrl.u32 2475754826, %v148
    %v152 = vor.u32 %v150, %v151
    %v153 = vshll.u32 2475754826, %v147
    %v154 = vshrl.u32 2131351028, %v148
    %v155 = vor.u32 %v153, %v154
    %v156 = vshll.u32 2131351028, %v147
    %v157 = vshrl.u32 2102212464, %v148
    %v158 = vor.u32 %v156, %v157
    %v159 = vshll.u32 2102212464, %v147
    %v160 = vshrl.u32 920167782, %v148
    %v161 = vor.u32 %v159, %v160
    %v162 = vshll.u32 920167782, %v147
    %v163 = vshrl.u32 1326507024, %v148
    %v164 = vor.u32 %v162, %v163
    %vm165 = vcmp.lt.s32.totalorder %v146, 1
    %vm166 = vcmp.lt.s32.totalorder %v146, 2
    %vm167 = vcmp.lt.s32.totalorder %v146, 3
    %vm168 = vcmp.lt.s32.totalorder %v146, 4
    %v169 = vsel %vm165, %v149, %v152
    %v170 = vsel %vm168, %v158, 2102212464
    %v171 = vsel %vm167, %v155, %v170
    %v172 = vsel %vm166, %v169, %v171
    %v173 = vsel %vm165, %v152, %v155
    %v174 = vsel %vm168, %v161, 920167782
    %v175 = vsel %vm167, %v158, %v174
    %v176 = vsel %vm166, %v173, %v175
    %v177 = vsel %vm165, %v155, %v158
    %v178 = vsel %vm168, %v164, 1326507024
    %v179 = vsel %vm167, %v161, %v178
    %v180 = vsel %vm166, %v177, %v179
    %v181 = vshll.u32 %v141, 8
    %v182 = vmul.u32.u64.compose %v181, %v180
    %v183 = vextract.low.u32 %v182
    %v184 = vextract.high.u32 %v182
    %v185 = vmul.u32.u64.compose %v181, %v176
    %v186 = vextract.low.u32 %v185
    %v187 = vextract.high.u32 %v185
    %v188 = vmul.u32 %v181, %v172
    %v189 = vadd.s32 %v184, %v186
    %vm190 = vc.u32 %v184, %v186
    %v191 = vadd.s32 %v187, 1
    %v192 = vsel %vm190, %v191, %v187
    %v193 = vadd.s32 %v188, %v192
    %v194 = vadd.s32 %v193, 536870912
    %v195 = vshrl.u32 %v194, 30
    %v196 = vshll.u32 %v195, 30
    %v197 = vsub.s32 %v193, %v196
    %vm198 = vcmp.lt.s32.totalorder %v197, 0
    %v199 = vsub.s32 0, %v197
    %v200 = vsel %vm198, %v199, %v197
    %v201 = vclz %v200
    %v202 = vsub.s32 %v201, 2
    %vm203 = vcmp.gt.s32.totalorder 0, %v202
    %v204 = vsel %vm203, 0, %v202
    %v205 = vsub.s32 32, %v204
    %v206 = vshll.u32 %v197, %v204
    %v207 = vshrl.u32 %v189, %v205
    %v208 = vor.u32 %v206, %v207
    %v209 = vsub.s32 4294967266, %v204
    %v210 = vadd.s32 %v209, 127
    %v211 = vshll.u32 %v210, 23
    %v212 = vor.u32 4788187, %v211
    %v213 = vand.u32 2147483647, %v212
    %v215 = vcvt.s32.f32 %v208
    %v216 = vmul.f32 %v215, %v213
    %v217 = vxor.u32 %v216, 2147483648
    %v218 = vsel %vm135, %v217, %v216
    %v219 = vsub.s32 4, %v195
    %v220 = vsel %vm135, %v219, %v195
    %v221 = vsel %vm134, %v29, %v218
    %v222 = vsel %vm134, 0, %v220
    %v223 = vcosq.f32.pop %v221
    %v224 = vsinq.f32.pop %v221
    %vm225 = vweird.f32 %v29
    %v226 = vand.u32 %v222, 3
    %vm227 = vcmp.lt.s32.totalorder %v226, 2
    %vm228 = vcmp.eq.s32.totalorder %v226, 0
    %v229 = vxor.u32 %v224, 2147483648
    %v230 = vsel %vm228, %v223, %v229
    %vm231 = vcmp.eq.s32.totalorder %v226, 2
    %v232 = vxor.u32 %v223, 2147483648
    %v233 = vsel %vm231, %v232, %v224
    %v234 = vsel %vm227, %v230, %v233
    %v235 = vsel %vm225, nan, %v234
    %v236 = vadd.f32 %v132, 1.0
    %v237 = vadd.f32 %v235, 1.0
    %v238 = vld [vmem:[#allocation2] sm:$0xff]
    %v239 = vld [vmem:[#allocation2 + $0x8] sm:$0xff]
    %v240 = vld [vmem:[#allocation2 + $0x10] sm:$0xff]
    %v241 = vld [vmem:[#allocation2 + $0x18] sm:$0xff]
    %v242 = vld [vmem:[#allocation2 + $0x20] sm:$0xff]
    %v243 = vld [vmem:[#allocation2 + $0x28] sm:$0xff]
    %v244 = vld [vmem:[#allocation2 + $0x30] sm:$0xff]
    %v245 = vld [vmem:[#allocation2 + $0x38] sm:$0xff]
    %v248 = vlaneseq
    %v249 = vshrl.u32 %v248, 7
    %v250 = vsub.s32 0, %v249
    %v251 = vrot.slane %v236, %v250
    %v252 = vlaneseq
    %v253 = vshrl.u32 %v252, 7
    %v254 = vsub.s32 0, %v253
    %v255 = vrot.slane %v237, %v254
    %v258 = vmul.f32 %v238, %v251
    %v259 = vmul.f32 %v239, %v251
    %v260 = vmul.f32 %v240, %v251
    %v261 = vmul.f32 %v241, %v251
    %v262 = vmul.f32 %v242, %v255
    %v263 = vmul.f32 %v243, %v255
    %v264 = vmul.f32 %v244, %v255
    %v265 = vmul.f32 %v245, %v255
    %266 = vst [vmem:[#allocation5] sm:$0xff] %v258
    %267 = vst [vmem:[#allocation5 + $0x8] sm:$0xff] %v259
    %268 = vst [vmem:[#allocation5 + $0x10] sm:$0xff] %v260
    %269 = vst [vmem:[#allocation5 + $0x18] sm:$0xff] %v261
    %270 = vst [vmem:[#allocation5 + $0x20] sm:$0xff] %v262
    %271 = vst [vmem:[#allocation5 + $0x28] sm:$0xff] %v263
    %272 = vst [vmem:[#allocation5 + $0x30] sm:$0xff] %v264
    %273 = vst [vmem:[#allocation5 + $0x38] sm:$0xff] %v265
    // Predicated region
    $region14: #{tpu_custom_call.1} parent=1 // pred_check
      _
    $region15: #{tpu_custom_call.1} parent=1 // pred_check_branch
      %275 = sbr.rel (0) target = $region17
    $region16: #{tpu_custom_call.1} parent=1 // pred_region
      %s277 = ssub.s32 1024, 1024
      %278 = vsyncadd [#allocation4], %s277
      %s279 = sshll.u32 [#allocation5], 4
      %s280 = int_to_ptr.vmem [resolvable:$true] %s279
      %285 = dma.vmem_to_hbm [thread:$0]  %s280, 1024, %s2, [#allocation4], 128, 128, 8
    $region17: #{tpu_custom_call.1} parent=1 // pred_fallthru
      _
    // Predicated region
    $region18: #{tpu_custom_call.1} parent=1 // pred_check
      _
    $region19: #{tpu_custom_call.1} parent=1 // pred_check_branch
      %287 = sbr.rel (0) target = $region21
    $region20: #{tpu_custom_call.1} parent=1 // pred_region
      %288 = dma.done [#allocation4], 1024
    $region21: #{tpu_custom_call.1} parent=1 // pred_fallthru
      _
    %289 = vsyncpa [#allocation3], 1
    %290 = vsyncpa [#allocation4], 1

</llo_original>
